<compile_context>
chip_gen: v7x
topology: tpu7x:2x2x1
jax: 0.10.0
libtpu: 0.0.40
codegen_flags: <defaults>
</compile_context>

<pallas_src>
import functools

import jax
import jax.numpy as jnp
from jax.experimental import pallas as pl
from jax.experimental.pallas import tpu as pltpu


# ---------------------------------------------------------------------------
# Shared helpers (used both inside the kernel and by the pure-JAX reference so
# that dropout masks and the logsigmoid match bit-for-bit).
# ---------------------------------------------------------------------------
def _keep_mask(ids, seed, stream):
    """Bernoulli(0.5) keep-mask from a counter-based integer hash (lowbias32).

    `ids` are global element ids (int32/uint32); `seed`/`stream` are static
    Python ints.  Pure uint32 arithmetic -> identical results on TPU, in
    interpret mode and on the host.
    """
    x = ids.astype(jnp.uint32)
    x = x + jnp.uint32((seed + stream * 0x9E3779B9) & 0xFFFFFFFF)
    x = x ^ (x >> 16)
    x = x * jnp.uint32(0x7FEB352D)
    x = x ^ (x >> 15)
    x = x * jnp.uint32(0x846CA68B)
    x = x ^ (x >> 16)
    return (x & jnp.uint32(1)) == jnp.uint32(0)


def _log_sigmoid(x):
    # Numerically stable log(sigmoid(x)) = min(x, 0) - log1p(exp(-|x|)).
    return jnp.minimum(x, 0.0) - jnp.log1p(jnp.exp(-jnp.abs(x)))


def _pick_block_b(batch, max_tile=1024):
    """Largest multiple-of-8 batch tile <= max_tile dividing `batch`; prefer
    >=2 grid steps so dimension_semantics=('parallel',) can use both v7x TCs."""
    if batch <= max_tile:
        if batch % 2 == 0 and (batch // 2) % 8 == 0:
            return batch // 2
        return batch
    for d in range(max_tile, 7, -1):
        if batch % d == 0 and d % 8 == 0:
            return d
    return batch  # fallback: single (large) tile, still correct


# ---------------------------------------------------------------------------
# Kernel
# ---------------------------------------------------------------------------
def cbow_kernel(v_ref, u_ref, un_ref, out_ref, *, seed, block_b, embed, num_neg):
    row0 = pl.program_id(0) * block_b

    # Upcast right after load so bf16 embedding storage works unchanged
    # (v5e has no bf16 VALU; the converts hide under the exposed DMA).
    v = v_ref[...].astype(jnp.float32)    # (Bblk, E)   context  (C == 1 squeezed)
    u = u_ref[...].astype(jnp.float32)    # (Bblk, E)   target   (T == 1 squeezed)
    un = un_ref[...].astype(jnp.float32)  # (Bblk, K, E) negatives

    # Global element ids (tile-invariant: same masks regardless of block_b).
    rows2 = jax.lax.broadcasted_iota(jnp.int32, (block_b, embed), 0) + row0
    cols2 = jax.lax.broadcasted_iota(jnp.int32, (block_b, embed), 1)
    ids2 = rows2 * embed + cols2

    rows3 = jax.lax.broadcasted_iota(jnp.int32, (block_b, num_neg, embed), 0) + row0
    ks3 = jax.lax.broadcasted_iota(jnp.int32, (block_b, num_neg, embed), 1)
    cols3 = jax.lax.broadcasted_iota(jnp.int32, (block_b, num_neg, embed), 2)
    ids3 = (rows3 * num_neg + ks3) * embed + cols3

    # Dropout (p = 0.5) applied as select; no f32 mask tensors, no mask outputs.
    v_m = jnp.where(_keep_mask(ids2, seed, 0), v, 0.0)               # masked, UNscaled
    u_m = jnp.where(_keep_mask(ids2, seed, 1), u, 0.0)
    un_sum = jnp.sum(jnp.where(_keep_mask(ids3, seed, 2), un, 0.0), axis=1)  # (Bblk, E)

    # Inverted-dropout scale (2.0 per dropout, two factors per dot) folded into
    # a single *4.0 on the scalar scores.
    pos = 4.0 * jnp.sum(u_m * v_m, axis=-1, keepdims=True)           # (Bblk, 1)
    neg = -4.0 * jnp.sum(un_sum * v_m, axis=-1, keepdims=True)       # (Bblk, 1)

    loss = _log_sigmoid(pos) + _log_sigmoid(neg)                     # (Bblk, 1)
    partial = jnp.sum(loss)

    # Lane/sublane-dense (8, 128) unmasked store of the per-block partial sum.
    out_ref[...] = jnp.full(out_ref.shape, partial, dtype=out_ref.dtype)


# ---------------------------------------------------------------------------
# Wrapper
# ---------------------------------------------------------------------------
def cbow_forward(V, U, ctx_words, target_words, neg_words, seed, block_b=None):
    B, C = ctx_words.shape
    _, T = target_words.shape
    _, K = neg_words.shape
    E = V.shape[1]
    assert C == 1 and T == 1, \
        "original model's .squeeze(2) implies a single context/target word"

    if block_b is None:
        block_b = _pick_block_b(B)
    assert B % block_b == 0, "batch must be divisible by the batch tile"
    nb = B // block_b

    # Embedding lookups (gather) — still plain-JAX glue for now.
    # TODO(synk): fuse via PrefetchScalarGridSpec indices + per-row DMA from
    # V/U kept in HBM to avoid materializing un_emb.
    v_emb = jnp.take(V, ctx_words[:, 0], axis=0)       # (B, E)
    u_emb = jnp.take(U, target_words[:, 0], axis=0)    # (B, E)
    un_emb = jnp.take(U, neg_words, axis=0)            # (B, K, E)

    kernel = functools.partial(cbow_kernel, seed=int(seed), block_b=block_b,
                               embed=E, num_neg=K)

    partials = pl.pallas_call(
        kernel,
        out_shape=jax.ShapeDtypeStruct((nb, 8, 128), jnp.float32),
        grid=(nb,),
        in_specs=[
            pl.BlockSpec((block_b, E), lambda b: (b, 0)),        # v
            pl.BlockSpec((block_b, E), lambda b: (b, 0)),        # u
            pl.BlockSpec((block_b, K, E), lambda b: (b, 0, 0)),  # u_neg
        ],
        out_specs=pl.BlockSpec((1, 8, 128), lambda b: (b, 0, 0)),
        compiler_params=pltpu.CompilerParams(
            dimension_semantics=("parallel",),
            vmem_limit_bytes=48 * 1024 * 1024,   # headroom under v7x's 64 MiB
        ),
    )(v_emb, u_emb, un_emb)

    # -mean(logsigmoid(pos) + logsigmoid(neg)) over the B*T loss entries (T==1).
    loss = -jnp.sum(partials[:, 0, 0]) / jnp.float32(B * T)
    return loss


# ---------------------------------------------------------------------------
# Pure-JAX reference (mirrors the PyTorch forward; replays the same masks).
# ---------------------------------------------------------------------------
def reference_loss(V, U, ctx_words, target_words, neg_words, seed):
    B = ctx_words.shape[0]
    K = neg_words.shape[1]
    E = V.shape[1]

    v_emb = jnp.take(V, ctx_words[:, 0], axis=0).astype(jnp.float32)
    u_emb = jnp.take(U, target_words[:, 0], axis=0).astype(jnp.float32)
    un_emb = jnp.take(U, neg_words, axis=0).astype(jnp.float32)

    ids2 = jnp.arange(B)[:, None] * E + jnp.arange(E)[None, :]
    ids3 = (jnp.arange(B)[:, None, None] * K
            + jnp.arange(K)[None, :, None]) * E + jnp.arange(E)[None, None, :]

    v = jnp.where(_keep_mask(ids2, seed, 0), v_emb, 0.0) * 2.0          # F.dropout(., 0.5)
    u = jnp.where(_keep_mask(ids2, seed, 1), u_emb, 0.0) * 2.0
    un = -(jnp.where(_keep_mask(ids3, seed, 2), un_emb, 0.0) * 2.0)     # u_neg

    pos = jnp.sum(u * v, axis=-1)                                       # (B,) == pos_score[:, 0]
    neg = jnp.sum(jnp.einsum('bke,be->bk', un, v), axis=1)              # (B,) == neg_score[:, 0]
    loss = _log_sigmoid(pos) + _log_sigmoid(neg)
    return -jnp.mean(loss)


if __name__ == "__main__":
    vocab_size = 512
    embedding_size = 128
    B, C, T, K = 8, 1, 1, 8

    key = jax.random.PRNGKey(0)
    kV, kU, kc, kt, kn = jax.random.split(key, 5)

    # nn.Embedding default init: N(0, 1)
    V = jax.random.normal(kV, (vocab_size, embedding_size), dtype=jnp.float32)
    U = jax.random.normal(kU, (vocab_size, embedding_size), dtype=jnp.float32)

    ctx_words = jax.random.randint(kc, (B, C), 0, vocab_size, dtype=jnp.int32)
    target_words = jax.random.randint(kt, (B, T), 0, vocab_size, dtype=jnp.int32)
    neg_words = jax.random.randint(kn, (B, K), 0, vocab_size, dtype=jnp.int32)

    seed = 1234
    loss = jax.block_until_ready(
        cbow_forward(V, U, ctx_words, target_words, neg_words, seed))
    ref = jax.block_until_ready(
        reference_loss(V, U, ctx_words, target_words, neg_words, seed))

    assert bool(jnp.isfinite(loss)), loss
    assert jnp.allclose(loss, ref, rtol=1e-5, atol=1e-5), (loss, ref)

    print("KERNEL_OK")
</pallas_src>

<mosaic_0001>
module attributes {stable_mosaic.version = 11 : i64} {
  func.func @cbow_kernel(%arg0: i32, %arg1: memref<8x128xf32, #tpu.memory_space<vmem>>, %arg2: memref<8x128xf32, #tpu.memory_space<vmem>>, %arg3: memref<8x8x128xf32, #tpu.memory_space<vmem>>, %arg4: memref<1x8x128xf32, #tpu.memory_space<vmem>>) attributes {dimension_semantics = [#tpu.dimension_semantics<parallel>], iteration_bounds = array<i64: 1>, scalar_prefetch = 0 : i64, scratch_operands = 0 : i64, tpu.core_type = #tpu.core_type<tc>, window_params = [{transform_indices = @transform_0, window_bounds = array<i64: 8, 128>}, {transform_indices = @transform_1, window_bounds = array<i64: 8, 128>}, {transform_indices = @transform_2, window_bounds = array<i64: 8, 8, 128>}, {transform_indices = @transform_3, window_bounds = array<i64: 1, 8, 128>}]} {
    %c8_i32 = arith.constant 8 : i32
    %0 = arith.muli %arg0, %c8_i32 : i32
    %c0 = arith.constant 0 : index
    %c0_0 = arith.constant 0 : index
    %1 = vector.load %arg1[%c0, %c0_0] : memref<8x128xf32, #tpu.memory_space<vmem>>, vector<8x128xf32>
    %c0_1 = arith.constant 0 : index
    %c0_2 = arith.constant 0 : index
    %2 = vector.load %arg2[%c0_1, %c0_2] : memref<8x128xf32, #tpu.memory_space<vmem>>, vector<8x128xf32>
    %c0_3 = arith.constant 0 : index
    %c0_4 = arith.constant 0 : index
    %c0_5 = arith.constant 0 : index
    %3 = vector.load %arg3[%c0_3, %c0_4, %c0_5] : memref<8x8x128xf32, #tpu.memory_space<vmem>>, vector<8x8x128xf32>
    %4 = tpu.iota {dimensions = array<i32: 0>} : vector<8x128xi32>
    %5 = vector.broadcast %0 : i32 to vector<8x128xi32>
    %6 = arith.addi %4, %5 : vector<8x128xi32>
    %7 = tpu.iota {dimensions = array<i32: 1>} : vector<8x128xi32>
    %c128_i32 = arith.constant 128 : i32
    %8 = vector.broadcast %c128_i32 : i32 to vector<8x128xi32>
    %9 = arith.muli %6, %8 : vector<8x128xi32>
    %10 = arith.addi %9, %7 : vector<8x128xi32>
    %11 = tpu.iota {dimensions = array<i32: 0>} : vector<8x8x128xi32>
    %12 = vector.broadcast %0 : i32 to vector<8x8x128xi32>
    %13 = arith.addi %11, %12 : vector<8x8x128xi32>
    %14 = tpu.iota {dimensions = array<i32: 1>} : vector<8x8x128xi32>
    %15 = tpu.iota {dimensions = array<i32: 2>} : vector<8x8x128xi32>
    %c8_i32_6 = arith.constant 8 : i32
    %16 = vector.broadcast %c8_i32_6 : i32 to vector<8x8x128xi32>
    %17 = arith.muli %13, %16 : vector<8x8x128xi32>
    %18 = arith.addi %17, %14 : vector<8x8x128xi32>
    %c128_i32_7 = arith.constant 128 : i32
    %19 = vector.broadcast %c128_i32_7 : i32 to vector<8x8x128xi32>
    %20 = arith.muli %18, %19 : vector<8x8x128xi32>
    %21 = arith.addi %20, %15 : vector<8x8x128xi32>
    %c1234_i32 = arith.constant 1234 : i32
    %22 = vector.broadcast %c1234_i32 : i32 to vector<8x128xi32>
    %23 = arith.addi %10, %22 : vector<8x128xi32>
    %c16_i32 = arith.constant 16 : i32
    %24 = vector.broadcast %c16_i32 : i32 to vector<8x128xi32>
    %25 = arith.shrui %23, %24 : vector<8x128xi32>
    %26 = arith.xori %23, %25 : vector<8x128xi32>
    %c2146121005_i32 = arith.constant 2146121005 : i32
    %27 = vector.broadcast %c2146121005_i32 : i32 to vector<8x128xi32>
    %28 = arith.muli %26, %27 : vector<8x128xi32>
    %c15_i32 = arith.constant 15 : i32
    %29 = vector.broadcast %c15_i32 : i32 to vector<8x128xi32>
    %30 = arith.shrui %28, %29 : vector<8x128xi32>
    %31 = arith.xori %28, %30 : vector<8x128xi32>
    %c-2073254261_i32 = arith.constant -2073254261 : i32
    %32 = vector.broadcast %c-2073254261_i32 : i32 to vector<8x128xi32>
    %33 = arith.muli %31, %32 : vector<8x128xi32>
    %c16_i32_8 = arith.constant 16 : i32
    %34 = vector.broadcast %c16_i32_8 : i32 to vector<8x128xi32>
    %35 = arith.shrui %33, %34 : vector<8x128xi32>
    %36 = arith.xori %33, %35 : vector<8x128xi32>
    %c1_i32 = arith.constant 1 : i32
    %37 = vector.broadcast %c1_i32 : i32 to vector<8x128xi32>
    %38 = arith.andi %36, %37 : vector<8x128xi32>
    %c0_i32 = arith.constant 0 : i32
    %39 = vector.broadcast %c0_i32 : i32 to vector<8x128xi32>
    %40 = arith.cmpi eq, %38, %39 : vector<8x128xi32>
    %cst = arith.constant 0.000000e+00 : f32
    %41 = vector.broadcast %cst : f32 to vector<8x128xf32>
    %42 = arith.select %40, %1, %41 : vector<8x128xi1>, vector<8x128xf32>
    %c-1640530293_i32 = arith.constant -1640530293 : i32
    %43 = vector.broadcast %c-1640530293_i32 : i32 to vector<8x128xi32>
    %44 = arith.addi %10, %43 : vector<8x128xi32>
    %c16_i32_9 = arith.constant 16 : i32
    %45 = vector.broadcast %c16_i32_9 : i32 to vector<8x128xi32>
    %46 = arith.shrui %44, %45 : vector<8x128xi32>
    %47 = arith.xori %44, %46 : vector<8x128xi32>
    %c2146121005_i32_10 = arith.constant 2146121005 : i32
    %48 = vector.broadcast %c2146121005_i32_10 : i32 to vector<8x128xi32>
    %49 = arith.muli %47, %48 : vector<8x128xi32>
    %c15_i32_11 = arith.constant 15 : i32
    %50 = vector.broadcast %c15_i32_11 : i32 to vector<8x128xi32>
    %51 = arith.shrui %49, %50 : vector<8x128xi32>
    %52 = arith.xori %49, %51 : vector<8x128xi32>
    %c-2073254261_i32_12 = arith.constant -2073254261 : i32
    %53 = vector.broadcast %c-2073254261_i32_12 : i32 to vector<8x128xi32>
    %54 = arith.muli %52, %53 : vector<8x128xi32>
    %c16_i32_13 = arith.constant 16 : i32
    %55 = vector.broadcast %c16_i32_13 : i32 to vector<8x128xi32>
    %56 = arith.shrui %54, %55 : vector<8x128xi32>
    %57 = arith.xori %54, %56 : vector<8x128xi32>
    %c1_i32_14 = arith.constant 1 : i32
    %58 = vector.broadcast %c1_i32_14 : i32 to vector<8x128xi32>
    %59 = arith.andi %57, %58 : vector<8x128xi32>
    %c0_i32_15 = arith.constant 0 : i32
    %60 = vector.broadcast %c0_i32_15 : i32 to vector<8x128xi32>
    %61 = arith.cmpi eq, %59, %60 : vector<8x128xi32>
    %cst_16 = arith.constant 0.000000e+00 : f32
    %62 = vector.broadcast %cst_16 : f32 to vector<8x128xf32>
    %63 = arith.select %61, %2, %62 : vector<8x128xi1>, vector<8x128xf32>
    %c1013905476_i32 = arith.constant 1013905476 : i32
    %64 = vector.broadcast %c1013905476_i32 : i32 to vector<8x8x128xi32>
    %65 = arith.addi %21, %64 : vector<8x8x128xi32>
    %c16_i32_17 = arith.constant 16 : i32
    %66 = vector.broadcast %c16_i32_17 : i32 to vector<8x8x128xi32>
    %67 = arith.shrui %65, %66 : vector<8x8x128xi32>
    %68 = arith.xori %65, %67 : vector<8x8x128xi32>
    %c2146121005_i32_18 = arith.constant 2146121005 : i32
    %69 = vector.broadcast %c2146121005_i32_18 : i32 to vector<8x8x128xi32>
    %70 = arith.muli %68, %69 : vector<8x8x128xi32>
    %c15_i32_19 = arith.constant 15 : i32
    %71 = vector.broadcast %c15_i32_19 : i32 to vector<8x8x128xi32>
    %72 = arith.shrui %70, %71 : vector<8x8x128xi32>
    %73 = arith.xori %70, %72 : vector<8x8x128xi32>
    %c-2073254261_i32_20 = arith.constant -2073254261 : i32
    %74 = vector.broadcast %c-2073254261_i32_20 : i32 to vector<8x8x128xi32>
    %75 = arith.muli %73, %74 : vector<8x8x128xi32>
    %c16_i32_21 = arith.constant 16 : i32
    %76 = vector.broadcast %c16_i32_21 : i32 to vector<8x8x128xi32>
    %77 = arith.shrui %75, %76 : vector<8x8x128xi32>
    %78 = arith.xori %75, %77 : vector<8x8x128xi32>
    %c1_i32_22 = arith.constant 1 : i32
    %79 = vector.broadcast %c1_i32_22 : i32 to vector<8x8x128xi32>
    %80 = arith.andi %78, %79 : vector<8x8x128xi32>
    %c0_i32_23 = arith.constant 0 : i32
    %81 = vector.broadcast %c0_i32_23 : i32 to vector<8x8x128xi32>
    %82 = arith.cmpi eq, %80, %81 : vector<8x8x128xi32>
    %cst_24 = arith.constant 0.000000e+00 : f32
    %83 = vector.broadcast %cst_24 : f32 to vector<8x8x128xf32>
    %84 = arith.select %82, %3, %83 : vector<8x8x128xi1>, vector<8x8x128xf32>
    %cst_25 = arith.constant dense<0.000000e+00> : vector<8x128xf32>
    %85 = vector.multi_reduction <add>, %84, %cst_25 [1] : vector<8x8x128xf32> to vector<8x128xf32>
    %86 = arith.mulf %63, %42 : vector<8x128xf32>
    %cst_26 = arith.constant dense<0.000000e+00> : vector<8xf32>
    %87 = vector.multi_reduction <add>, %86, %cst_26 [1] : vector<8x128xf32> to vector<8xf32>
    %88 = vector.shape_cast %87 : vector<8xf32> to vector<8x1xf32>
    %cst_27 = arith.constant 4.000000e+00 : f32
    %89 = vector.broadcast %cst_27 : f32 to vector<8x1xf32>
    %90 = arith.mulf %89, %88 : vector<8x1xf32>
    %91 = arith.mulf %85, %42 : vector<8x128xf32>
    %cst_28 = arith.constant dense<0.000000e+00> : vector<8xf32>
    %92 = vector.multi_reduction <add>, %91, %cst_28 [1] : vector<8x128xf32> to vector<8xf32>
    %93 = vector.shape_cast %92 : vector<8xf32> to vector<8x1xf32>
    %cst_29 = arith.constant -4.000000e+00 : f32
    %94 = vector.broadcast %cst_29 : f32 to vector<8x1xf32>
    %95 = arith.mulf %94, %93 : vector<8x1xf32>
    %cst_30 = arith.constant 0.000000e+00 : f32
    %96 = vector.broadcast %cst_30 : f32 to vector<8x1xf32>
    %97 = arith.minimumf %90, %96 : vector<8x1xf32>
    %98 = math.absf %90 : vector<8x1xf32>
    %cst_31 = arith.constant 0.000000e+00 : f32
    %99 = vector.broadcast %cst_31 : f32 to vector<8x1xf32>
    %100 = arith.subf %99, %98 : vector<8x1xf32>
    %101 = math.exp %100 : vector<8x1xf32>
    %102 = math.log1p %101 : vector<8x1xf32>
    %103 = arith.subf %97, %102 : vector<8x1xf32>
    %cst_32 = arith.constant 0.000000e+00 : f32
    %104 = vector.broadcast %cst_32 : f32 to vector<8x1xf32>
    %105 = arith.minimumf %95, %104 : vector<8x1xf32>
    %106 = math.absf %95 : vector<8x1xf32>
    %cst_33 = arith.constant 0.000000e+00 : f32
    %107 = vector.broadcast %cst_33 : f32 to vector<8x1xf32>
    %108 = arith.subf %107, %106 : vector<8x1xf32>
    %109 = math.exp %108 : vector<8x1xf32>
    %110 = math.log1p %109 : vector<8x1xf32>
    %111 = arith.subf %105, %110 : vector<8x1xf32>
    %112 = arith.addf %103, %111 : vector<8x1xf32>
    %113 = vector.shape_cast %112 : vector<8x1xf32> to vector<1x8x1xf32>
    %cst_34 = arith.constant dense<0.000000e+00> : vector<1xf32>
    %114 = vector.multi_reduction <add>, %113, %cst_34 [1, 2] : vector<1x8x1xf32> to vector<1xf32>
    %115 = vector.shape_cast %114 : vector<1xf32> to vector<1x1x1xf32>
    %116 = vector.extract %115[0, 0, 0] : f32 from vector<1x1x1xf32>
    %117 = vector.broadcast %116 : f32 to vector<1x8x128xf32>
    %c0_35 = arith.constant 0 : index
    %c0_36 = arith.constant 0 : index
    %c0_37 = arith.constant 0 : index
    %118 = vector.load %arg4[%c0_35, %c0_36, %c0_37] : memref<1x8x128xf32, #tpu.memory_space<vmem>>, vector<1x8x128xf32>
    tpu.vector_store %arg4[%c0_35, %c0_36, %c0_37], %117 {strides = array<i32>} : memref<1x8x128xf32, #tpu.memory_space<vmem>>, vector<1x8x128xf32>,
    return
  }
  func.func @transform_0(%arg0: i32) -> (i32, i32) {
    %c0_i32 = arith.constant 0 : i32
    %c0_i32_0 = arith.constant 0 : i32
    return %arg0, %c0_i32 : i32, i32
  }
  func.func @transform_1(%arg0: i32) -> (i32, i32) {
    %c0_i32 = arith.constant 0 : i32
    %c0_i32_0 = arith.constant 0 : i32
    return %arg0, %c0_i32 : i32, i32
  }
  func.func @transform_2(%arg0: i32) -> (i32, i32, i32) {
    %c0_i32 = arith.constant 0 : i32
    %c0_i32_0 = arith.constant 0 : i32
    %c0_i32_1 = arith.constant 0 : i32
    return %arg0, %c0_i32, %c0_i32_0 : i32, i32, i32
  }
  func.func @transform_3(%arg0: i32) -> (i32, i32, i32) {
    %c0_i32 = arith.constant 0 : i32
    %c0_i32_0 = arith.constant 0 : i32
    %c0_i32_1 = arith.constant 0 : i32
    return %arg0, %c0_i32, %c0_i32_0 : i32, i32, i32
  }
}

</mosaic_0001>

<llo_original>
// kernel: tpu_custom_call.1
$region0: #{tpu_custom_call.1}
  #allocation0 [shape = 'u32[]', space=smem, size = 0x4, offset = 0x4, fixed_abs, tag = 'smem constant byte address 0x4 - core index']
  #allocation1 [shape = 'u32[144,128]{1,0:T(1,128)}', space=vmem, size = 0x12000, scoped, tag = 'internal scratch']
  %s0 = inlined_call_operand.hbm [shape: f32[8,128], index: 0, kind: input, shape index: {}]
  %s1 = inlined_call_operand.hbm [shape: f32[8,128], index: 1, kind: input, shape index: {}]
  %s2 = inlined_call_operand.hbm [shape: f32[8,8,128], index: 2, kind: input, shape index: {}]
  %s3 = inlined_call_operand.hbm [shape: f32[1,8,128], index: 3, kind: output, shape index: {}]
  %s4 = sld [smem:[#allocation0]]
  $region34: #{tpu_custom_call.1} parent=0
    _
  %s6 = ssub.s32 1, %s4
  %s7 = scalar_select 0, %s6, %s4
  $region1: #{tpu_custom_call.1} parent=0
    #allocation2 [shape = 'u8[4096]{0}', space=vmem, size = 0x1000, scoped, tag = 'input window, operand 0, single buffered']
    #allocation3 [shape = 's32[1]{0}', space=sflag, size = 0x4, scoped, tag = 'scoped memory for tpu_custom_call.1']
    #allocation4 [shape = 's32[1]{0}', space=sflag, size = 0x4, scoped, tag = 'scoped memory for tpu_custom_call.1']
    #allocation5 [shape = 'u8[4096]{0}', space=vmem, size = 0x1000, scoped, tag = 'input window, operand 1, single buffered']
    #allocation6 [shape = 's32[1]{0}', space=sflag, size = 0x4, scoped, tag = 'scoped memory for tpu_custom_call.1']
    #allocation7 [shape = 'u8[32768]{0}', space=vmem, size = 0x8000, scoped, tag = 'input window, operand 2, single buffered']
    #allocation8 [shape = 'u8[4096]{0}', space=vmem, size = 0x1000, scoped, tag = 'output window, operand 0, single buffered']
    %8 = vsyncpa [#allocation3], 0
    %9 = vsyncpa [#allocation6], 0
    %10 = vsyncpa [#allocation4], 0
    // Predicated region
    $region2: #{tpu_custom_call.1} parent=1 // pred_check
      _
    $region3: #{tpu_custom_call.1} parent=1 // pred_check_branch
      %12 = sbr.rel (0) target = $region5
    $region4: #{tpu_custom_call.1} parent=1 // pred_region
      %s14 = ssub.s32 128, 128
      %15 = vsyncadd [#allocation3], %s14
      %s17 = sshll.u32 [#allocation2], 4
      %s18 = int_to_ptr.vmem [resolvable:$true] %s17
      %20 = dma.hbm_to_vmem [thread:$0]  %s0, 128, %s18, [#allocation3]
    $region5: #{tpu_custom_call.1} parent=1 // pred_fallthru
      _
    // Predicated region
    $region6: #{tpu_custom_call.1} parent=1 // pred_check
      _
    $region7: #{tpu_custom_call.1} parent=1 // pred_check_branch
      %22 = sbr.rel (0) target = $region9
    $region8: #{tpu_custom_call.1} parent=1 // pred_region
      %s24 = ssub.s32 128, 128
      %25 = vsyncadd [#allocation6], %s24
      %s27 = sshll.u32 [#allocation5], 4
      %s28 = int_to_ptr.vmem [resolvable:$true] %s27
      %30 = dma.hbm_to_vmem [thread:$0]  %s1, 128, %s28, [#allocation6]
    $region9: #{tpu_custom_call.1} parent=1 // pred_fallthru
      _
    // Predicated region
    $region10: #{tpu_custom_call.1} parent=1 // pred_check
      _
    $region11: #{tpu_custom_call.1} parent=1 // pred_check_branch
      %32 = sbr.rel (0) target = $region13
    $region12: #{tpu_custom_call.1} parent=1 // pred_region
      %s34 = ssub.s32 1024, 1024
      %35 = vsyncadd [#allocation6], %s34
      %s36 = sshll.u32 [#allocation7], 4
      %s37 = int_to_ptr.vmem [resolvable:$true] %s36
      %42 = dma.hbm_to_vmem [thread:$0]  %s2, 1024, %s37, [#allocation6], 128, 128, 8
    $region13: #{tpu_custom_call.1} parent=1 // pred_fallthru
      _
    // Predicated region
    $region14: #{tpu_custom_call.1} parent=1 // pred_check
      _
    $region15: #{tpu_custom_call.1} parent=1 // pred_check_branch
      %44 = sbr.rel (0) target = $region17
    $region16: #{tpu_custom_call.1} parent=1 // pred_region
      %45 = dma.done [#allocation3], 128
    $region17: #{tpu_custom_call.1} parent=1 // pred_fallthru
      _
    // Predicated region
    $region18: #{tpu_custom_call.1} parent=1 // pred_check
      _
    $region19: #{tpu_custom_call.1} parent=1 // pred_check_branch
      %47 = sbr.rel (0) target = $region21
    $region20: #{tpu_custom_call.1} parent=1 // pred_region
      %48 = dma.done [#allocation6], 128
    $region21: #{tpu_custom_call.1} parent=1 // pred_fallthru
      _
    // Predicated region
    $region22: #{tpu_custom_call.1} parent=1 // pred_check
      _
    $region23: #{tpu_custom_call.1} parent=1 // pred_check_branch
      %50 = sbr.rel (0) target = $region25
    $region24: #{tpu_custom_call.1} parent=1 // pred_region
      %51 = dma.done [#allocation6], 1024
    $region25: #{tpu_custom_call.1} parent=1 // pred_fallthru
      _
    %s52 = smul.u32 0, 8
    %v53 = vld [vmem:[#allocation2] sm:$0xff]
    %v54 = vld [vmem:[#allocation5] sm:$0xff]
    %v55 = vld [vmem:[#allocation7] sm:$0xff]
    %v56 = vld [vmem:[#allocation7 + $0x8] sm:$0xff]
    %v57 = vld [vmem:[#allocation7 + $0x10] sm:$0xff]
    %v58 = vld [vmem:[#allocation7 + $0x18] sm:$0xff]
    %v59 = vld [vmem:[#allocation7 + $0x20] sm:$0xff]
    %v60 = vld [vmem:[#allocation7 + $0x28] sm:$0xff]
    %v61 = vld [vmem:[#allocation7 + $0x30] sm:$0xff]
    %v62 = vld [vmem:[#allocation7 + $0x38] sm:$0xff]
    %v63 = vlaneseq
    %v64 = vshrl.u32 %v63, 7
    %v65 = vstv %s52
    %v66 = vadd.s32 %v64, %v65
    %v67 = vlaneseq
    %v68 = vand.u32 %v67, 127
    %v69 = vmul.u32 %v66, 128
    %v70 = vadd.s32 %v69, %v68
    %v71 = vadd.s32 %v65, 1
    %v72 = vadd.s32 %v65, 2
    %v73 = vadd.s32 %v65, 3
    %v74 = vadd.s32 %v65, 4
    %v75 = vadd.s32 %v65, 5
    %v76 = vadd.s32 %v65, 6
    %v77 = vadd.s32 %v65, 7
    %v78 = vmul.u32 %v65, 8
    %v79 = vmul.u32 %v71, 8
    %v80 = vmul.u32 %v72, 8
    %v81 = vmul.u32 %v73, 8
    %v82 = vmul.u32 %v74, 8
    %v83 = vmul.u32 %v75, 8
    %v84 = vmul.u32 %v76, 8
    %v85 = vmul.u32 %v77, 8
    %v86 = vadd.s32 %v78, %v64
    %v87 = vadd.s32 %v79, %v64
    %v88 = vadd.s32 %v80, %v64
    %v89 = vadd.s32 %v81, %v64
    %v90 = vadd.s32 %v82, %v64
    %v91 = vadd.s32 %v83, %v64
    %v92 = vadd.s32 %v84, %v64
    %v93 = vadd.s32 %v85, %v64
    %v94 = vmul.u32 %v86, 128
    %v95 = vmul.u32 %v87, 128
    %v96 = vmul.u32 %v88, 128
    %v97 = vmul.u32 %v89, 128
    %v98 = vmul.u32 %v90, 128
    %v99 = vmul.u32 %v91, 128
    %v100 = vmul.u32 %v92, 128
    %v101 = vmul.u32 %v93, 128
    %v102 = vadd.s32 %v94, %v68
    %v103 = vadd.s32 %v95, %v68
    %v104 = vadd.s32 %v96, %v68
    %v105 = vadd.s32 %v97, %v68
    %v106 = vadd.s32 %v98, %v68
    %v107 = vadd.s32 %v99, %v68
    %v108 = vadd.s32 %v100, %v68
    %v109 = vadd.s32 %v101, %v68
    %v110 = vadd.s32 %v70, 1234
    %v111 = vshrl.u32 %v110, 16
    %v112 = vxor.u32 %v110, %v111
    %v113 = vmul.u32 %v112, 2146121005
    %v114 = vshrl.u32 %v113, 15
    %v115 = vxor.u32 %v113, %v114
    %v116 = vmul.u32 %v115, 2221713035
    %v117 = vshrl.u32 %v116, 16
    %v118 = vxor.u32 %v116, %v117
    %v119 = vand.u32 %v118, 1
    %vm120 = vcmp.eq.s32.totalorder %v119, 0
    %v121 = vsel %vm120, %v53, 0.0
    %v122 = vadd.s32 %v70, 2654437003
    %v123 = vshrl.u32 %v122, 16
    %v124 = vxor.u32 %v122, %v123
    %v125 = vmul.u32 %v124, 2146121005
    %v126 = vshrl.u32 %v125, 15
    %v127 = vxor.u32 %v125, %v126
    %v128 = vmul.u32 %v127, 2221713035
    %v129 = vshrl.u32 %v128, 16
    %v130 = vxor.u32 %v128, %v129
    %v131 = vand.u32 %v130, 1
    %vm132 = vcmp.eq.s32.totalorder %v131, 0
    %v133 = vsel %vm132, %v54, 0.0
    %v134 = vadd.s32 %v102, 1013905476
    %v135 = vadd.s32 %v103, 1013905476
    %v136 = vadd.s32 %v104, 1013905476
    %v137 = vadd.s32 %v105, 1013905476
    %v138 = vadd.s32 %v106, 1013905476
    %v139 = vadd.s32 %v107, 1013905476
    %v140 = vadd.s32 %v108, 1013905476
    %v141 = vadd.s32 %v109, 1013905476
    %v142 = vshrl.u32 %v134, 16
    %v143 = vshrl.u32 %v135, 16
    %v144 = vshrl.u32 %v136, 16
    %v145 = vshrl.u32 %v137, 16
    %v146 = vshrl.u32 %v138, 16
    %v147 = vshrl.u32 %v139, 16
    %v148 = vshrl.u32 %v140, 16
    %v149 = vshrl.u32 %v141, 16
    %v150 = vxor.u32 %v134, %v142
    %v151 = vxor.u32 %v135, %v143
    %v152 = vxor.u32 %v136, %v144
    %v153 = vxor.u32 %v137, %v145
    %v154 = vxor.u32 %v138, %v146
    %v155 = vxor.u32 %v139, %v147
    %v156 = vxor.u32 %v140, %v148
    %v157 = vxor.u32 %v141, %v149
    %v158 = vmul.u32 %v150, 2146121005
    %v159 = vmul.u32 %v151, 2146121005
    %v160 = vmul.u32 %v152, 2146121005
    %v161 = vmul.u32 %v153, 2146121005
    %v162 = vmul.u32 %v154, 2146121005
    %v163 = vmul.u32 %v155, 2146121005
    %v164 = vmul.u32 %v156, 2146121005
    %v165 = vmul.u32 %v157, 2146121005
    %v166 = vshrl.u32 %v158, 15
    %v167 = vshrl.u32 %v159, 15
    %v168 = vshrl.u32 %v160, 15
    %v169 = vshrl.u32 %v161, 15
    %v170 = vshrl.u32 %v162, 15
    %v171 = vshrl.u32 %v163, 15
    %v172 = vshrl.u32 %v164, 15
    %v173 = vshrl.u32 %v165, 15
    %v174 = vxor.u32 %v158, %v166
    %v175 = vxor.u32 %v159, %v167
    %v176 = vxor.u32 %v160, %v168
    %v177 = vxor.u32 %v161, %v169
    %v178 = vxor.u32 %v162, %v170
    %v179 = vxor.u32 %v163, %v171
    %v180 = vxor.u32 %v164, %v172
    %v181 = vxor.u32 %v165, %v173
    %v182 = vmul.u32 %v174, 2221713035
    %v183 = vmul.u32 %v175, 2221713035
    %v184 = vmul.u32 %v176, 2221713035
    %v185 = vmul.u32 %v177, 2221713035
    %v186 = vmul.u32 %v178, 2221713035
    %v187 = vmul.u32 %v179, 2221713035
    %v188 = vmul.u32 %v180, 2221713035
    %v189 = vmul.u32 %v181, 2221713035
    %v190 = vshrl.u32 %v182, 16
    %v191 = vshrl.u32 %v183, 16
    %v192 = vshrl.u32 %v184, 16
    %v193 = vshrl.u32 %v185, 16
    %v194 = vshrl.u32 %v186, 16
    %v195 = vshrl.u32 %v187, 16
    %v196 = vshrl.u32 %v188, 16
    %v197 = vshrl.u32 %v189, 16
    %v198 = vxor.u32 %v182, %v190
    %v199 = vxor.u32 %v183, %v191
    %v200 = vxor.u32 %v184, %v192
    %v201 = vxor.u32 %v185, %v193
    %v202 = vxor.u32 %v186, %v194
    %v203 = vxor.u32 %v187, %v195
    %v204 = vxor.u32 %v188, %v196
    %v205 = vxor.u32 %v189, %v197
    %v206 = vand.u32 %v198, 1
    %v207 = vand.u32 %v199, 1
    %v208 = vand.u32 %v200, 1
    %v209 = vand.u32 %v201, 1
    %v210 = vand.u32 %v202, 1
    %v211 = vand.u32 %v203, 1
    %v212 = vand.u32 %v204, 1
    %v213 = vand.u32 %v205, 1
    %vm214 = vcmp.eq.s32.totalorder %v206, 0
    %vm215 = vcmp.eq.s32.totalorder %v207, 0
    %vm216 = vcmp.eq.s32.totalorder %v208, 0
    %vm217 = vcmp.eq.s32.totalorder %v209, 0
    %vm218 = vcmp.eq.s32.totalorder %v210, 0
    %vm219 = vcmp.eq.s32.totalorder %v211, 0
    %vm220 = vcmp.eq.s32.totalorder %v212, 0
    %vm221 = vcmp.eq.s32.totalorder %v213, 0
    %v222 = vsel %vm214, %v55, 0.0
    %v223 = vsel %vm215, %v56, 0.0
    %v224 = vsel %vm216, %v57, 0.0
    %v225 = vsel %vm217, %v58, 0.0
    %v226 = vsel %vm218, %v59, 0.0
    %v227 = vsel %vm219, %v60, 0.0
    %v228 = vsel %vm220, %v61, 0.0
    %v229 = vsel %vm221, %v62, 0.0
    %v230 = vrot.slane %v222, 4
    %v231 = vadd.f32 %v222, %v230
    %v232 = vrot.slane %v231, 2
    %v233 = vadd.f32 %v231, %v232
    %v234 = vrot.slane %v233, 1
    %v235 = vadd.f32 %v233, %v234
    %v236 = vrot.slane %v223, 4
    %v237 = vadd.f32 %v223, %v236
    %v238 = vrot.slane %v237, 2
    %v239 = vadd.f32 %v237, %v238
    %v240 = vrot.slane %v239, 1
    %v241 = vadd.f32 %v239, %v240
    %v242 = vrot.slane %v224, 4
    %v243 = vadd.f32 %v224, %v242
    %v244 = vrot.slane %v243, 2
    %v245 = vadd.f32 %v243, %v244
    %v246 = vrot.slane %v245, 1
    %v247 = vadd.f32 %v245, %v246
    %v248 = vrot.slane %v225, 4
    %v249 = vadd.f32 %v225, %v248
    %v250 = vrot.slane %v249, 2
    %v251 = vadd.f32 %v249, %v250
    %v252 = vrot.slane %v251, 1
    %v253 = vadd.f32 %v251, %v252
    %v254 = vrot.slane %v226, 4
    %v255 = vadd.f32 %v226, %v254
    %v256 = vrot.slane %v255, 2
    %v257 = vadd.f32 %v255, %v256
    %v258 = vrot.slane %v257, 1
    %v259 = vadd.f32 %v257, %v258
    %v260 = vrot.slane %v227, 4
    %v261 = vadd.f32 %v227, %v260
    %v262 = vrot.slane %v261, 2
    %v263 = vadd.f32 %v261, %v262
    %v264 = vrot.slane %v263, 1
    %v265 = vadd.f32 %v263, %v264
    %v266 = vrot.slane %v228, 4
    %v267 = vadd.f32 %v228, %v266
    %v268 = vrot.slane %v267, 2
    %v269 = vadd.f32 %v267, %v268
    %v270 = vrot.slane %v269, 1
    %v271 = vadd.f32 %v269, %v270
    %v272 = vrot.slane %v229, 4
    %v273 = vadd.f32 %v229, %v272
    %v274 = vrot.slane %v273, 2
    %v275 = vadd.f32 %v273, %v274
    %v276 = vrot.slane %v275, 1
    %v277 = vadd.f32 %v275, %v276
    %v278 = vmul.f32 %v133, %v121
    %279 = vadd.xlane.f32.xlu0 %v278
    %v280 = vpop.xlane.xlu0 %279
    %v281 = vmul.f32 %v280, 4.0
    %v283 = vrot.slane %v121, 1
    %v284 = vrot.slane %v121, 2
    %v285 = vrot.slane %v121, 3
    %v286 = vrot.slane %v121, 4
    %v287 = vrot.slane %v121, 5
    %v288 = vrot.slane %v121, 6
    %v289 = vrot.slane %v121, 7
    %v298 = vmul.f32 %v235, %v121
    %v299 = vmul.f32 %v241, %v283
    %v300 = vmul.f32 %v247, %v284
    %v301 = vmul.f32 %v253, %v285
    %v302 = vmul.f32 %v259, %v286
    %v303 = vmul.f32 %v265, %v287
    %v304 = vmul.f32 %v271, %v288
    %v305 = vmul.f32 %v277, %v289
    %v314 = vrot.slane %v299, 7
    %vm315 = vcmask 1041409
    %v316 = vsel %vm315, %v314, %v298
    %v317 = vrot.slane %v300, 6
    %vm318 = vcmask 1042434
    %v319 = vsel %vm318, %v317, %v316
    %v320 = vrot.slane %v301, 5
    %vm321 = vcmask 1043459
    %v322 = vsel %vm321, %v320, %v319
    %v323 = vrot.slane %v302, 4
    %vm324 = vcmask 1044484
    %v325 = vsel %vm324, %v323, %v322
    %v326 = vrot.slane %v303, 3
    %vm327 = vcmask 1045509
    %v328 = vsel %vm327, %v326, %v325
    %v329 = vrot.slane %v304, 2
    %vm330 = vcmask 1046534
    %v331 = vsel %vm330, %v329, %v328
    %v332 = vrot.slane %v305, 1
    %vm333 = vcmask 1047559
    %v334 = vsel %vm333, %v332, %v331
    %336 = vadd.xlane.f32.xlu0 %v334
    %v337 = vpop.xlane.xlu0 %336
    %v338 = vmul.f32 %v337, -4.0
    %v339 = vmin.f32 %v281, 0.0
    %v340 = vand.u32 2147483647, %v281
    %v341 = vsub.f32 0.0, %v340
    %v342 = vmul.f32 %v341, 1.442695
    %v343 = vpow.pop %v342
    %v344 = vadd.f32 %v343, 1.0
    %v345 = vlog2.pop %v344
    %v346 = vmul.f32 %v345, 0.6931472
    %v347 = vmul.f32 -0.5, %v343
    %v348 = vadd.f32 %v347, 1.0
    %v349 = vmul.f32 %v348, %v343
    %v350 = vand.u32 2147483647, %v343
    %vm351 = vcmp.lt.f32.partialorder %v350, 0.0004427343
    %v352 = vsel %vm351, %v349, %v346
    %v353 = vsub.f32 %v339, %v352
    %v354 = vmin.f32 %v338, 0.0
    %v355 = vand.u32 2147483647, %v338
    %v356 = vsub.f32 0.0, %v355
    %v357 = vmul.f32 %v356, 1.442695
    %v358 = vpow.pop %v357
    %v359 = vadd.f32 %v358, 1.0
    %v360 = vlog2.pop %v359
    %v361 = vmul.f32 %v360, 0.6931472
    %v362 = vmul.f32 -0.5, %v358
    %v363 = vadd.f32 %v362, 1.0
    %v364 = vmul.f32 %v363, %v358
    %v365 = vand.u32 2147483647, %v358
    %vm366 = vcmp.lt.f32.partialorder %v365, 0.0004427343
    %v367 = vsel %vm366, %v364, %v361
    %v368 = vsub.f32 %v354, %v367
    %v369 = vadd.f32 %v353, %v368
    %vm370 = vcmask 7168
    %v371 = vsel %vm370, %v369, 0.0
    %372 = vadd.xlane.f32.xlu0 %v371
    %v373 = vpop.xlane.xlu0 %372
    %v374 = vrot.slane %v373, 4
    %v375 = vadd.f32 %v373, %v374
    %v376 = vrot.slane %v375, 2
    %v377 = vadd.f32 %v375, %v376
    %v378 = vrot.slane %v377, 1
    %v379 = vadd.f32 %v377, %v378
    %s380 = vtos %v379
    %v381 = vstv %s380
    %382 = vst [vmem:[#allocation8] sm:$0xff] %v381
    // Predicated region
    $region26: #{tpu_custom_call.1} parent=1 // pred_check
      _
    $region27: #{tpu_custom_call.1} parent=1 // pred_check_branch
      %384 = sbr.rel (0) target = $region29
    $region28: #{tpu_custom_call.1} parent=1 // pred_region
      %s386 = ssub.s32 128, 128
      %387 = vsyncadd [#allocation4], %s386
      %s389 = sshll.u32 [#allocation8], 4
      %s390 = int_to_ptr.vmem [resolvable:$true] %s389
      %392 = dma.vmem_to_hbm [thread:$0]  %s390, 128, %s3, [#allocation4]
    $region29: #{tpu_custom_call.1} parent=1 // pred_fallthru
      _
    // Predicated region
    $region30: #{tpu_custom_call.1} parent=1 // pred_check
      _
    $region31: #{tpu_custom_call.1} parent=1 // pred_check_branch
      %394 = sbr.rel (0) target = $region33
    $region32: #{tpu_custom_call.1} parent=1 // pred_region
      %395 = dma.done [#allocation4], 128
    $region33: #{tpu_custom_call.1} parent=1 // pred_fallthru
      _
    %396 = vsyncpa [#allocation3], 1
    %397 = vsyncpa [#allocation6], 1
    %398 = vsyncpa [#allocation4], 1

</llo_original>
